<compile_context>
chip_gen: v7x
topology: tpu7x:2x2x1
jax: 0.10.0
libtpu: 0.0.40
codegen_flags: <defaults>
</compile_context>

<pallas_src>
import jax
import jax.numpy as jnp
from jax.experimental import pallas as pl
from jax.experimental.pallas import tpu as pltpu


def _round_up(x: int, m: int) -> int:
    return (x + m - 1) // m * m


def _cdiv(a: int, b: int) -> int:
    return -(-a // b)


def _distributed_net_kernel(xt_ref, w1_ref, b1_ref, w2_ref, b2_ref, ot_ref):
    # xt: (D, TB)   w1: (Hp, D)   b1: (Hp, 1)
    # w2: (O, Hp)   b2: (O, 1)    ot: (O, TB)
    h = jnp.dot(w1_ref[...], xt_ref[...], preferred_element_type=jnp.float32)
    y = jnp.tanh(h + b1_ref[...])
    out = jnp.dot(w2_ref[...], y, preferred_element_type=jnp.float32) + b2_ref[...]
    ot_ref[...] = out.astype(ot_ref.dtype)


def prepare_params(w1, b1, w2, b2):
    """Convert torch-layout params (W1 (H,D), b1 (H,), W2 (O,H), b2 (O,)) into
    kernel-ready arrays.  Pads the hidden dim 10 -> 16 (exact: tanh(0)=0 and
    the padded W2 columns are 0) and reshapes biases to column vectors.
    Call once at init time, not per forward (hoisted out of the hot path)."""
    H, D = w1.shape
    O, H2 = w2.shape
    assert H2 == H and b1.shape == (H,) and b2.shape == (O,)
    Hp = _round_up(H, 8)
    w1p = jnp.zeros((Hp, D), jnp.float32).at[:H, :].set(w1.astype(jnp.float32))
    b1p = jnp.zeros((Hp, 1), jnp.float32).at[:H, 0].set(b1.astype(jnp.float32))
    w2p = jnp.zeros((O, Hp), jnp.float32).at[:, :H].set(w2.astype(jnp.float32))
    b2p = b2.astype(jnp.float32).reshape(O, 1)
    return w1p, b1p, w2p, b2p


def distributed_net_forward(x, w1p, b1p, w2p, b2p, *, tile_b: int = 16384):
    """x: (B, D) float32; params from prepare_params.  Returns (B, O) float32
    (O == 1 for DistributedNet), matching torch: tanh(x @ W1^T + b1) @ W2^T + b2."""
    B, D = x.shape
    Hp, D2 = w1p.shape
    O = w2p.shape[0]
    assert D2 == D and b1p.shape == (Hp, 1)
    assert w2p.shape == (O, Hp) and b2p.shape == (O, 1)

    LANE = 128
    # Grid sizing: big lane-dense tiles, tight batch rounding, and >= 2 steps
    # when B is large enough so v7x's two TensorCores both get work.
    grid_n = max(1, _cdiv(B, tile_b))
    if B >= 2 * LANE:
        grid_n = max(grid_n, 2)
    tb = _round_up(_cdiv(B, grid_n), LANE)
    Bp = grid_n * tb

    # One streaming pass: put batch on the lane axis (+ pad to the tile grid).
    # TODO(synk): a producer that already emits x^T (D, B) could skip this pass.
    x_t = x.astype(jnp.float32).T
    if Bp != B:
        x_t = jnp.pad(x_t, ((0, 0), (0, Bp - B)))

    out_t = pl.pallas_call(
        _distributed_net_kernel,
        out_shape=jax.ShapeDtypeStruct((O, Bp), jnp.float32),
        grid=(grid_n,),
        in_specs=[
            pl.BlockSpec((D, tb), lambda i: (0, i)),    # x^T tile per grid step
            pl.BlockSpec((Hp, D), lambda i: (0, 0)),    # W1 resident
            pl.BlockSpec((Hp, 1), lambda i: (0, 0)),    # b1 resident
            pl.BlockSpec((O, Hp), lambda i: (0, 0)),    # W2 resident
            pl.BlockSpec((O, 1), lambda i: (0, 0)),     # b2 resident
        ],
        out_specs=pl.BlockSpec((O, tb), lambda i: (0, i)),
        compiler_params=pltpu.CompilerParams(
            dimension_semantics=("parallel",),          # megacore-shard batch on v7x
        ),
    )(x_t, w1p, b1p, w2p, b2p)

    # (O, Bp) -> (B, O); for O == 1 this transpose is just a reshape.
    return out_t[:, :B].T


def init_params(key, input_size: int, hidden: int = 10, out: int = 1):
    """Synthetic init mimicking torch.nn.Linear layouts: weight (out, in)."""
    k1, k2, k3, k4 = jax.random.split(key, 4)
    bound1 = 1.0 / jnp.sqrt(input_size)
    bound2 = 1.0 / jnp.sqrt(hidden)
    w1 = jax.random.uniform(k1, (hidden, input_size), jnp.float32, -bound1, bound1)
    b1 = jax.random.uniform(k2, (hidden,), jnp.float32, -bound1, bound1)
    w2 = jax.random.uniform(k3, (out, hidden), jnp.float32, -bound2, bound2)
    b2 = jax.random.uniform(k4, (out,), jnp.float32, -bound2, bound2)
    return w1, b1, w2, b2


# TODO(synk): DistributedNet.controller() (torch.no_grad / FloatTensor / numpy
# flatten) is host-side glue around the same forward; not a kernel concern.

if __name__ == "__main__":
    key = jax.random.PRNGKey(0)
    k_x, k_p = jax.random.split(key)

    input_size = 8   # per-robot sensing vector size
    batch = 16       # number of robots / samples per forward

    x = jax.random.normal(k_x, (batch, input_size), dtype=jnp.float32)
    w1, b1, w2, b2 = init_params(k_p, input_size)
    params = prepare_params(w1, b1, w2, b2)   # one-time, outside hot path

    out = distributed_net_forward(x, *params)
    out = jax.block_until_ready(out)

    # Pure-JAX reference check of the fused kernel (torch semantics).
    ref = jnp.tanh(x @ w1.T + b1) @ w2.T + b2
    assert out.shape == (batch, 1)
    assert jnp.allclose(out, ref, atol=1e-5, rtol=1e-5)

    print("KERNEL_OK")
</pallas_src>

<mosaic_0001>
module attributes {stable_mosaic.version = 11 : i64} {
  func.func @_distributed_net_kernel(%arg0: i32, %arg1: memref<8x128xf32, #tpu.memory_space<vmem>>, %arg2: memref<16x8xf32, #tpu.memory_space<vmem>>, %arg3: memref<16x1xf32, #tpu.memory_space<vmem>>, %arg4: memref<1x16xf32, #tpu.memory_space<vmem>>, %arg5: memref<1x1xf32, #tpu.memory_space<vmem>>, %arg6: memref<1x128xf32, #tpu.memory_space<vmem>>) attributes {dimension_semantics = [#tpu.dimension_semantics<parallel>], iteration_bounds = array<i64: 1>, scalar_prefetch = 0 : i64, scratch_operands = 0 : i64, tpu.core_type = #tpu.core_type<tc>, window_params = [{transform_indices = @transform_0, window_bounds = array<i64: 8, 128>}, {pipeline_mode = #tpu.pipeline_mode<synchronous>, transform_indices = @transform_1, window_bounds = array<i64: 16, 8>}, {pipeline_mode = #tpu.pipeline_mode<synchronous>, transform_indices = @transform_2, window_bounds = array<i64: 16, 1>}, {pipeline_mode = #tpu.pipeline_mode<synchronous>, transform_indices = @transform_3, window_bounds = array<i64: 1, 16>}, {pipeline_mode = #tpu.pipeline_mode<synchronous>, transform_indices = @transform_4, window_bounds = array<i64: 1, 1>}, {transform_indices = @transform_5, window_bounds = array<i64: 1, 128>}]} {
    %c0 = arith.constant 0 : index
    %c0_0 = arith.constant 0 : index
    %0 = vector.load %arg2[%c0, %c0_0] : memref<16x8xf32, #tpu.memory_space<vmem>>, vector<16x8xf32>
    %c0_1 = arith.constant 0 : index
    %c0_2 = arith.constant 0 : index
    %1 = vector.load %arg1[%c0_1, %c0_2] : memref<8x128xf32, #tpu.memory_space<vmem>>, vector<8x128xf32>
    %cst = arith.constant dense<0.000000e+00> : vector<16x128xf32>
    %2 = tpu.matmul %0, %1, %cst {dimension_numbers = #tpu.dot_dimension_numbers<[1], [0], [0], [1], [0, 0, 1, 1], [], []>} : vector<16x8xf32>, vector<8x128xf32>, vector<16x128xf32> -> vector<16x128xf32>
    %c0_3 = arith.constant 0 : index
    %c0_4 = arith.constant 0 : index
    %3 = vector.load %arg3[%c0_3, %c0_4] : memref<16x1xf32, #tpu.memory_space<vmem>>, vector<16x1xf32>
    %4 = vector.broadcast %3 : vector<16x1xf32> to vector<16x128xf32>
    %5 = arith.addf %2, %4 : vector<16x128xf32>
    %6 = math.tanh %5 : vector<16x128xf32>
    %c0_5 = arith.constant 0 : index
    %c0_6 = arith.constant 0 : index
    %7 = vector.load %arg4[%c0_5, %c0_6] : memref<1x16xf32, #tpu.memory_space<vmem>>, vector<1x16xf32>
    %cst_7 = arith.constant dense<0.000000e+00> : vector<1x128xf32>
    %8 = tpu.matmul %7, %6, %cst_7 {dimension_numbers = #tpu.dot_dimension_numbers<[1], [0], [0], [1], [0, 0, 1, 1], [], []>} : vector<1x16xf32>, vector<16x128xf32>, vector<1x128xf32> -> vector<1x128xf32>
    %c0_8 = arith.constant 0 : index
    %c0_9 = arith.constant 0 : index
    %9 = vector.load %arg5[%c0_8, %c0_9] : memref<1x1xf32, #tpu.memory_space<vmem>>, vector<1x1xf32>
    %10 = vector.broadcast %9 : vector<1x1xf32> to vector<1x128xf32>
    %11 = arith.addf %8, %10 : vector<1x128xf32>
    %c0_10 = arith.constant 0 : index
    %c0_11 = arith.constant 0 : index
    %12 = vector.load %arg6[%c0_10, %c0_11] : memref<1x128xf32, #tpu.memory_space<vmem>>, vector<1x128xf32>
    tpu.vector_store %arg6[%c0_10, %c0_11], %11 {strides = array<i32>} : memref<1x128xf32, #tpu.memory_space<vmem>>, vector<1x128xf32>,
    return
  }
  func.func @transform_0(%arg0: i32) -> (i32, i32) {
    %c0_i32 = arith.constant 0 : i32
    %c0_i32_0 = arith.constant 0 : i32
    return %c0_i32, %arg0 : i32, i32
  }
  func.func @transform_1(%arg0: i32) -> (i32, i32) {
    %c0_i32 = arith.constant 0 : i32
    %c0_i32_0 = arith.constant 0 : i32
    %c0_i32_1 = arith.constant 0 : i32
    return %c0_i32, %c0_i32_0 : i32, i32
  }
  func.func @transform_2(%arg0: i32) -> (i32, i32) {
    %c0_i32 = arith.constant 0 : i32
    %c0_i32_0 = arith.constant 0 : i32
    %c0_i32_1 = arith.constant 0 : i32
    return %c0_i32, %c0_i32_0 : i32, i32
  }
  func.func @transform_3(%arg0: i32) -> (i32, i32) {
    %c0_i32 = arith.constant 0 : i32
    %c0_i32_0 = arith.constant 0 : i32
    %c0_i32_1 = arith.constant 0 : i32
    return %c0_i32, %c0_i32_0 : i32, i32
  }
  func.func @transform_4(%arg0: i32) -> (i32, i32) {
    %c0_i32 = arith.constant 0 : i32
    %c0_i32_0 = arith.constant 0 : i32
    %c0_i32_1 = arith.constant 0 : i32
    return %c0_i32, %c0_i32_0 : i32, i32
  }
  func.func @transform_5(%arg0: i32) -> (i32, i32) {
    %c0_i32 = arith.constant 0 : i32
    %c0_i32_0 = arith.constant 0 : i32
    return %c0_i32, %arg0 : i32, i32
  }
}

</mosaic_0001>

<llo_original>
// kernel: tpu_custom_call.1
$region0: #{tpu_custom_call.1}
  #allocation0 [shape = 'u32[]', space=smem, size = 0x4, offset = 0x4, fixed_abs, tag = 'smem constant byte address 0x4 - core index']
  #allocation1 [shape = 'u32[144,128]{1,0:T(1,128)}', space=vmem, size = 0x12000, scoped, tag = 'internal scratch']
  #allocation2 [shape = 'f32[1,1]{1,0:T(1,128)S(1)}', space=vmem, size = 0x200, scoped, tag = 'scoped memory for tpu_custom_call.1']
  %s0 = inlined_call_operand.vmem [shape: f32[8,128], index: 0, kind: input, shape index: {}]
  %s1 = inlined_call_operand.vmem [shape: f32[16,8], index: 1, kind: input, shape index: {}]
  %s2 = inlined_call_operand.vmem [shape: f32[16,1], index: 2, kind: input, shape index: {}]
  %s3 = inlined_call_operand.vmem [shape: f32[1,16], index: 3, kind: input, shape index: {}]
  %s4 = inlined_call_operand.<no memory space> [shape: f32[1,1], index: 4, kind: input, shape index: {}]
  %s5 = inlined_call_operand.hbm [shape: f32[1,128], index: 5, kind: output, shape index: {}]
  %s6 = sld [smem:[#allocation0]]
  $region30: #{tpu_custom_call.1} parent=0
    _
  %s8 = ssub.s32 1, %s6
  %s9 = scalar_select 0, %s8, %s6
  %v10 = vstv %s4
  %11 = vst [vmem:[#allocation2] sm:$0x1] %v10
  $region1: #{tpu_custom_call.1} parent=0
    #allocation3 [shape = 'u8[512]{0}', space=vmem, size = 0x400, scoped, tag = 'output window, operand 0, single buffered']
    #allocation4 [shape = 's32[1]{0}', space=sflag, size = 0x4, scoped, tag = 'scoped memory for tpu_custom_call.1']
    %12 = vsyncpa [#allocation4], 0
    // Predicated region
    $region2: #{tpu_custom_call.1} parent=1 // pred_check
      _
    $region3: #{tpu_custom_call.1} parent=1 // pred_check_branch
      %14 = sbr.rel (0) target = $region5
    $region4: #{tpu_custom_call.1} parent=1 // pred_region
      _
    $region5: #{tpu_custom_call.1} parent=1 // pred_fallthru
      _
    // Predicated region
    $region6: #{tpu_custom_call.1} parent=1 // pred_check
      _
    $region7: #{tpu_custom_call.1} parent=1 // pred_check_branch
      %16 = sbr.rel (0) target = $region9
    $region8: #{tpu_custom_call.1} parent=1 // pred_region
      _
    $region9: #{tpu_custom_call.1} parent=1 // pred_fallthru
      _
    // Predicated region
    $region10: #{tpu_custom_call.1} parent=1 // pred_check
      _
    $region11: #{tpu_custom_call.1} parent=1 // pred_check_branch
      %18 = sbr.rel (0) target = $region13
    $region12: #{tpu_custom_call.1} parent=1 // pred_region
      _
    $region13: #{tpu_custom_call.1} parent=1 // pred_fallthru
      _
    // Predicated region
    $region14: #{tpu_custom_call.1} parent=1 // pred_check
      _
    $region15: #{tpu_custom_call.1} parent=1 // pred_check_branch
      %20 = sbr.rel (0) target = $region17
    $region16: #{tpu_custom_call.1} parent=1 // pred_region
      _
    $region17: #{tpu_custom_call.1} parent=1 // pred_fallthru
      _
    // Predicated region
    $region18: #{tpu_custom_call.1} parent=1 // pred_check
      _
    $region19: #{tpu_custom_call.1} parent=1 // pred_check_branch
      %22 = sbr.rel (0) target = $region21
    $region20: #{tpu_custom_call.1} parent=1 // pred_region
      _
    $region21: #{tpu_custom_call.1} parent=1 // pred_fallthru
      _
    %v23 = vld [vmem:[%s1] sm:$0xff]
    %v24 = vld [vmem:[%s1 + $0x8] sm:$0xff]
    %v25 = vld [vmem:[%s0] sm:$0xff]
    %v26 = vld [vmem:[%s2] sm:$0xff]
    %v27 = vld [vmem:[%s2 + $0x8] sm:$0xff]
    %29 = vset.pattern.permute.xlu0 0
    %30 = vperm.xlu0 %29, %v26
    %v31 = vpop.permute.xlu0 %30
    %34 = vset.pattern.permute.xlu0 0
    %35 = vperm.xlu0 %34, %v27
    %v36 = vpop.permute.xlu0 %35
    %vm38 = vcmask 64512
    %v40 = vsel %vm38, %v23, 0
    %v43 = vsel %vm38, %v24, 0
    %45 = vmatprep.subr.mxu0 0.0
    %46 = vmatpush1.msra.mxu0 %v25
    %47 = vmatprep.subr.mxu0 0.0
    %48 = vmatpush1.msra.mxu0 0.0
    %49 = vmatprep.subr.mxu0 0.0
    %50 = vmatpush1.msra.mxu0 0.0
    %51 = vmatprep.subr.mxu0 0.0
    %52 = vmatpush1.msra.mxu0 0.0
    %53 = vmatprep.subr.mxu0 0.0
    %54 = vmatpush1.msra.mxu0 0.0
    %55 = vmatprep.subr.mxu0 0.0
    %56 = vmatpush1.msra.mxu0 0.0
    %57 = vmatprep.subr.mxu0 0.0
    %58 = vmatpush1.msra.mxu0 0.0
    %59 = vmatprep.subr.mxu0 0.0
    %60 = vmatpush1.msra.mxu0 0.0
    %61 = vmatprep.subr.mxu0 0.0
    %62 = vmatpush1.msra.mxu0 0.0
    %63 = vmatprep.subr.mxu0 0.0
    %64 = vmatpush1.msra.mxu0 0.0
    %65 = vmatprep.subr.mxu0 0.0
    %66 = vmatpush1.msra.mxu0 0.0
    %67 = vmatprep.subr.mxu0 0.0
    %68 = vmatpush1.msra.mxu0 0.0
    %69 = vmatprep.subr.mxu0 0.0
    %70 = vmatpush1.msra.mxu0 0.0
    %71 = vmatprep.subr.mxu0 0.0
    %72 = vmatpush1.msra.mxu0 0.0
    %73 = vmatprep.subr.mxu0 0.0
    %74 = vmatpush1.msra.mxu0 0.0
    %75 = vmatprep.subr.mxu0 0.0
    %76 = vmatpush1.msra.mxu0 0.0
    %77 = vmatprep.subr.mxu0 0.0
    %78 = vmatpush1.msra.mxu0 0.0
    %79 = vmatprep.subr.mxu0 0.0
    %80 = vmatpush1.msra.mxu0 0.0
    %81 = vmatprep.subr.mxu0 0.0
    %82 = vmatpush1.msra.mxu0 0.0
    %83 = vmatprep.subr.mxu0 0.0
    %84 = vmatpush1.msra.mxu0 0.0
    %85 = vmatprep.subr.mxu0 0.0
    %86 = vmatpush1.msra.mxu0 0.0
    %87 = vmatprep.subr.mxu0 0.0
    %88 = vmatpush1.msra.mxu0 0.0
    %89 = vmatprep.subr.mxu0 0.0
    %90 = vmatpush1.msra.mxu0 0.0
    %91 = vmatprep.subr.mxu0 0.0
    %92 = vmatpush1.msra.mxu0 0.0
    %93 = vmatprep.subr.mxu0 0.0
    %94 = vmatpush1.msra.mxu0 0.0
    %95 = vmatprep.subr.mxu0 0.0
    %96 = vmatpush1.msra.mxu0 0.0
    %97 = vmatprep.subr.mxu0 0.0
    %98 = vmatpush1.msra.mxu0 0.0
    %99 = vmatprep.subr.mxu0 0.0
    %100 = vmatpush1.msra.mxu0 0.0
    %101 = vmatprep.subr.mxu0 0.0
    %102 = vmatpush1.msra.mxu0 0.0
    %103 = vmatprep.subr.mxu0 0.0
    %104 = vmatpush1.msra.mxu0 0.0
    %105 = vmatprep.subr.mxu0 0.0
    %106 = vmatpush1.msra.mxu0 0.0
    %107 = vmatprep.subr.mxu0 0.0
    %108 = vmatpush1.msra.mxu0 0.0
    %109 = vmatprep.mubr.f32.mxu0 0.0
    %110 = vmatmul.mubr.f32.gmra.mrb[0].mxu0 %v40
    %v111 = vpop.f32.mrb[0].mxu0
    %v112 = vadd.f32 %v31, %v111
    %v113 = vpop.f32.mrb[0].mxu0
    %114 = vmatprep.mubr.f32.mxu0 0.0
    %115 = vmatmul.mubr.f32.gmra.mrb[0].mxu0 %v43
    %v116 = vpop.f32.mrb[0].mxu0
    %v117 = vadd.f32 %v36, %v116
    %v118 = vpop.f32.mrb[0].mxu0
    %119 = vdwg.mxu0
    %v120 = vtanh.pop %v112
    %v121 = vtanh.pop %v117
    %v122 = vld [vmem:[%s3] sm:$0x1]
    %v123 = vld [vmem:[#allocation2] sm:$0x1]
    %125 = vset.pattern.permute.xlu0 0
    %126 = vperm.xlu0 %125, %v123
    %v127 = vpop.permute.xlu0 %126
    %v129 = vlaneseq
    %v130 = vshrl.u32 %v129, 7
    %v131 = vsub.s32 0, %v130
    %v132 = vrot.slane %v127, %v131
    %vm133 = vcmask 130048
    %v135 = vsel %vm133, %v122, 0
    %137 = vmatprep.subr.mxu0 0.0
    %138 = vmatpush1.msra.mxu0 %v120
    %139 = vmatprep.subr.mxu0 0.0
    %140 = vmatpush1.msra.mxu0 %v121
    %141 = vmatprep.subr.mxu0 0.0
    %142 = vmatpush1.msra.mxu0 0.0
    %143 = vmatprep.subr.mxu0 0.0
    %144 = vmatpush1.msra.mxu0 0.0
    %145 = vmatprep.subr.mxu0 0.0
    %146 = vmatpush1.msra.mxu0 0.0
    %147 = vmatprep.subr.mxu0 0.0
    %148 = vmatpush1.msra.mxu0 0.0
    %149 = vmatprep.subr.mxu0 0.0
    %150 = vmatpush1.msra.mxu0 0.0
    %151 = vmatprep.subr.mxu0 0.0
    %152 = vmatpush1.msra.mxu0 0.0
    %153 = vmatprep.subr.mxu0 0.0
    %154 = vmatpush1.msra.mxu0 0.0
    %155 = vmatprep.subr.mxu0 0.0
    %156 = vmatpush1.msra.mxu0 0.0
    %157 = vmatprep.subr.mxu0 0.0
    %158 = vmatpush1.msra.mxu0 0.0
    %159 = vmatprep.subr.mxu0 0.0
    %160 = vmatpush1.msra.mxu0 0.0
    %161 = vmatprep.subr.mxu0 0.0
    %162 = vmatpush1.msra.mxu0 0.0
    %163 = vmatprep.subr.mxu0 0.0
    %164 = vmatpush1.msra.mxu0 0.0
    %165 = vmatprep.subr.mxu0 0.0
    %166 = vmatpush1.msra.mxu0 0.0
    %167 = vmatprep.subr.mxu0 0.0
    %168 = vmatpush1.msra.mxu0 0.0
    %169 = vmatprep.subr.mxu0 0.0
    %170 = vmatpush1.msra.mxu0 0.0
    %171 = vmatprep.subr.mxu0 0.0
    %172 = vmatpush1.msra.mxu0 0.0
    %173 = vmatprep.subr.mxu0 0.0
    %174 = vmatpush1.msra.mxu0 0.0
    %175 = vmatprep.subr.mxu0 0.0
    %176 = vmatpush1.msra.mxu0 0.0
    %177 = vmatprep.subr.mxu0 0.0
    %178 = vmatpush1.msra.mxu0 0.0
    %179 = vmatprep.subr.mxu0 0.0
    %180 = vmatpush1.msra.mxu0 0.0
    %181 = vmatprep.subr.mxu0 0.0
    %182 = vmatpush1.msra.mxu0 0.0
    %183 = vmatprep.subr.mxu0 0.0
    %184 = vmatpush1.msra.mxu0 0.0
    %185 = vmatprep.subr.mxu0 0.0
    %186 = vmatpush1.msra.mxu0 0.0
    %187 = vmatprep.subr.mxu0 0.0
    %188 = vmatpush1.msra.mxu0 0.0
    %189 = vmatprep.subr.mxu0 0.0
    %190 = vmatpush1.msra.mxu0 0.0
    %191 = vmatprep.subr.mxu0 0.0
    %192 = vmatpush1.msra.mxu0 0.0
    %193 = vmatprep.subr.mxu0 0.0
    %194 = vmatpush1.msra.mxu0 0.0
    %195 = vmatprep.subr.mxu0 0.0
    %196 = vmatpush1.msra.mxu0 0.0
    %197 = vmatprep.subr.mxu0 0.0
    %198 = vmatpush1.msra.mxu0 0.0
    %199 = vmatprep.subr.mxu0 0.0
    %200 = vmatpush1.msra.mxu0 0.0
    %201 = vmatprep.mubr.f32.mxu0 0.0
    %202 = vmatmul.mubr.f32.gmra.mrb[0].mxu0 %v135
    %v203 = vpop.f32.mrb[0].mxu0
    %v204 = vadd.f32 %v132, %v203
    %v205 = vpop.f32.mrb[0].mxu0
    %206 = vdwg.mxu0
    %207 = vst [vmem:[#allocation3] sm:$0x1] %v204
    // Predicated region
    $region22: #{tpu_custom_call.1} parent=1 // pred_check
      _
    $region23: #{tpu_custom_call.1} parent=1 // pred_check_branch
      %209 = sbr.rel (0) target = $region25
    $region24: #{tpu_custom_call.1} parent=1 // pred_region
      %s211 = ssub.s32 16, 16
      %212 = vsyncadd [#allocation4], %s211
      %s214 = sshll.u32 [#allocation3], 4
      %s215 = int_to_ptr.vmem [resolvable:$true] %s214
      %217 = dma.vmem_to_hbm [thread:$0]  %s215, 16, %s5, [#allocation4]
    $region25: #{tpu_custom_call.1} parent=1 // pred_fallthru
      _
    // Predicated region
    $region26: #{tpu_custom_call.1} parent=1 // pred_check
      _
    $region27: #{tpu_custom_call.1} parent=1 // pred_check_branch
      %219 = sbr.rel (0) target = $region29
    $region28: #{tpu_custom_call.1} parent=1 // pred_region
      %220 = dma.done [#allocation4], 16
    $region29: #{tpu_custom_call.1} parent=1 // pred_fallthru
      _
    %221 = vsyncpa [#allocation4], 1

</llo_original>
